<compile_context>
chip_gen: v7x
topology: tpu7x:2x2x1
jax: 0.10.0
libtpu: 0.0.40
codegen_flags: <defaults>
</compile_context>

<pallas_src>
import functools

import jax
import jax.numpy as jnp
import numpy as np
from jax import lax
from jax.experimental import pallas as pl
from jax.experimental.pallas import tpu as pltpu


def _round_up(x: int, m: int) -> int:
    return (x + m - 1) // m * m


def _vmem_budget():
    """Returns (streamed-tile budget bytes, scoped vmem limit bytes) per generation."""
    try:
        cap = pltpu.get_tpu_info().vmem_capacity_bytes
    except Exception:  # not on TPU / older jax: assume the smallest (v7x, 64 MiB)
        cap = 64 * 1024 * 1024
    if cap >= 100 * 1024 * 1024:                     # v5e / v6e: 128 MiB VMEM
        return 24 * 1024 * 1024, 64 * 1024 * 1024
    return 12 * 1024 * 1024, 32 * 1024 * 1024        # v7x: 64 MiB VMEM


def _pick_block_tokens(T: int, H: int, D: int, itemsize: int, budget_bytes: int) -> int:
    """Largest token tile whose double-buffered blocks + f32 temporaries fit the budget."""
    hd_pad = _round_up(H, 8) * _round_up(D, 128)      # VMEM tiles are (8,128)-padded
    stream_per_row = 2 * 4 * hd_pad * itemsize        # q,k in + q,k out, double-buffered
    temp_per_row = 8 * hd_pad * 4                     # in-kernel f32 temporaries
    tt = budget_bytes // (stream_per_row + temp_per_row)
    tt = int(max(8, min(tt, 1024)))
    if T <= tt:
        return T
    return max(8, (tt // 8) * 8)


def _rope_kernel(off_ref, freq_ref, sign_ref, q_ref, k_ref, qo_ref, ko_ref,
                 *, block_tokens, half, rot_dim, head_dim):
    b = pl.program_id(0)
    t = pl.program_id(1)

    # Positions of the tokens in this tile; per-sequence offset read from SMEM.
    start = off_ref[b] + t * block_tokens
    pos = (start + lax.broadcasted_iota(jnp.int32, (block_tokens, 1), 0)
           ).astype(jnp.float32)                              # (tt, 1)

    # Trig computed once per tile, dense over (tokens, head_dim), shared by all heads
    # of both q and k.  freq_lane is 0 on the non-rotary tail -> cos=1 there, and
    # sign_lane is 0 there -> the sin term vanishes, so tail lanes pass through.
    ang = pos * freq_ref[...]                                 # (tt, D)
    cos = jnp.cos(ang)[:, None, :]                            # (tt, 1, D)
    sin = (jnp.sin(ang) * sign_ref[...])[:, None, :]          # sign-folded sin

    def apply(x_ref, o_ref):
        x = x_ref[...].astype(jnp.float32)                    # (tt, H, D)
        # "Partner" lane of the rotation: x[..., d+half] for d < half,
        # x[..., d-half] for half <= d < rot_dim, don't-care on the tail.
        pieces = [x[..., half:rot_dim], x[..., :half]]
        if rot_dim < head_dim:
            pieces.append(x[..., rot_dim:])
        partner = jnp.concatenate(pieces, axis=-1)
        o_ref[...] = (x * cos + partner * sin).astype(o_ref.dtype)

    apply(q_ref, qo_ref)
    apply(k_ref, ko_ref)


def rotary_embedding_forward(query, key, offset, *, rot_dim=None, base=10000.0,
                             block_tokens=None):
    """query/key: (B, T, H, D); offset: python int, scalar, or (B,) int array."""
    B, T, H, D = query.shape
    assert key.shape == (B, T, H, D), "query/key must share (B, T, H, D)"
    rot_dim = D if rot_dim is None else int(rot_dim)
    assert 2 <= rot_dim <= D and rot_dim % 2 == 0
    half = rot_dim // 2

    # Per-sequence offsets -> (B,) int32, scalar-prefetched into SMEM.
    offs = jnp.asarray(offset, dtype=jnp.int32)
    if offs.ndim == 0:
        offs = jnp.broadcast_to(offs, (B,))
    offs = offs.reshape(B)

    # Tiny host-side per-lane constants: inverse frequency of each lane and the sign
    # of the rotated term; both zero on the non-rotary tail (in-kernel pass-through).
    d_idx = np.arange(D)
    exps = np.arange(0, rot_dim, 2, dtype=np.float32) / np.float32(rot_dim)
    inv_freq = (1.0 / (np.float32(base) ** exps)).astype(np.float32)       # (half,)
    freq_lane = np.where(d_idx < rot_dim, inv_freq[d_idx % half], 0.0)
    freq_lane = jnp.asarray(freq_lane.astype(np.float32).reshape(1, D))
    sign_lane = np.where(d_idx < half, -1.0, np.where(d_idx < rot_dim, 1.0, 0.0))
    sign_lane = jnp.asarray(sign_lane.astype(np.float32).reshape(1, D))

    tile_budget, vmem_limit = _vmem_budget()
    if block_tokens is None:
        block_tokens = _pick_block_tokens(T, H, D, query.dtype.itemsize, tile_budget)
    block_tokens = int(max(1, min(block_tokens, T)))
    grid = (B, pl.cdiv(T, block_tokens))                      # partial last tile is masked

    kernel = functools.partial(_rope_kernel, block_tokens=block_tokens, half=half,
                               rot_dim=rot_dim, head_dim=D)

    qk_spec = pl.BlockSpec((None, block_tokens, H, D), lambda b, i, off: (b, i, 0, 0))
    lane_spec = pl.BlockSpec((1, D), lambda b, i, off: (0, 0))

    elems = B * T * H * D
    cost = pl.CostEstimate(
        flops=8 * 2 * elems,
        transcendentals=2 * B * T * D,
        bytes_accessed=2 * elems * (query.dtype.itemsize + key.dtype.itemsize),
    )

    q_out, k_out = pl.pallas_call(
        kernel,
        out_shape=(jax.ShapeDtypeStruct(query.shape, query.dtype),
                   jax.ShapeDtypeStruct(key.shape, key.dtype)),
        grid_spec=pltpu.PrefetchScalarGridSpec(
            num_scalar_prefetch=1,
            grid=grid,
            in_specs=[lane_spec, lane_spec, qk_spec, qk_spec],
            out_specs=[qk_spec, qk_spec],
        ),
        compiler_params=pltpu.CompilerParams(
            dimension_semantics=("parallel", "parallel"),
            vmem_limit_bytes=vmem_limit,
        ),
        cost_estimate=cost,
    )(offs, freq_lane, sign_lane, query, key)
    return q_out, k_out


# ------------------------- pure-JAX reference (mirrors torch) -------------------------
def _rope_reference(query, key, offset, rot_dim, base=10000.0, max_len=256):
    B, T, H, D = query.shape
    inv_freq = 1.0 / base ** (jnp.arange(0, rot_dim, 2, dtype=jnp.float32) / rot_dim)
    t = jnp.arange(max_len, dtype=jnp.float32)
    freqs = jnp.einsum('i,j->ij', t, inv_freq)
    emb = jnp.concatenate([freqs, freqs], axis=-1)
    cos_tab, sin_tab = jnp.cos(emb), jnp.sin(emb)
    if isinstance(offset, int):
        cos = cos_tab[None, offset:offset + T, None, :]
        sin = sin_tab[None, offset:offset + T, None, :]
    else:
        positions = jnp.arange(T)[None, :] + offset[:, None]
        cos = cos_tab[positions][:, :, None, :]
        sin = sin_tab[positions][:, :, None, :]

    def rotate(x):
        x1 = x[..., :rot_dim // 2]
        x2 = x[..., rot_dim // 2:]
        return jnp.concatenate([-x2, x1], axis=-1)

    q = query[..., :rot_dim]
    k = key[..., :rot_dim]
    q = q * cos + rotate(q) * sin
    k = k * cos + rotate(k) * sin
    if rot_dim < D:
        q = jnp.concatenate([q, query[..., rot_dim:]], axis=-1)
        k = jnp.concatenate([k, key[..., rot_dim:]], axis=-1)
    return q, k


if __name__ == "__main__":
    # Small shapes consistent with RotaryEmbedding.forward: (B, T, H, D)
    B, T, H, D = 2, 8, 4, 64
    rng = jax.random.PRNGKey(0)
    kq, kk, kq2, kk2 = jax.random.split(rng, 4)
    q = jax.random.normal(kq, (B, T, H, D), dtype=jnp.float32)
    k = jax.random.normal(kk, (B, T, H, D), dtype=jnp.float32)

    # Case 1: scalar offset (incremental decoding with equal padding).
    q_out, k_out = rotary_embedding_forward(q, k, 3)
    jax.block_until_ready((q_out, k_out))
    q_ref, k_ref = _rope_reference(q, k, 3, D)
    assert q_out.shape == (B, T, H, D) and k_out.shape == (B, T, H, D)
    assert jnp.allclose(q_out, q_ref, atol=2e-4, rtol=2e-4)
    assert jnp.allclose(k_out, k_ref, atol=2e-4, rtol=2e-4)

    # Case 2: per-sequence offsets (different padding per batch element).
    offs = jnp.array([0, 5], dtype=jnp.int32)
    q_out2, k_out2 = rotary_embedding_forward(q, k, offs)
    jax.block_until_ready((q_out2, k_out2))
    q_ref2, k_ref2 = _rope_reference(q, k, offs, D)
    assert jnp.allclose(q_out2, q_ref2, atol=2e-4, rtol=2e-4)
    assert jnp.allclose(k_out2, k_ref2, atol=2e-4, rtol=2e-4)

    # Case 3: rotary dim < head dim and a sequence length that does not divide the
    # token tile: exercises the in-kernel tail pass-through and the masked partial
    # final block (no wrapper-side padding / slicing / concatenation passes).
    T3 = 12
    q3 = jax.random.normal(kq2, (B, T3, H, D), dtype=jnp.float32)
    k3 = jax.random.normal(kk2, (B, T3, H, D), dtype=jnp.float32)
    q_out3, k_out3 = rotary_embedding_forward(q3, k3, 2, rot_dim=32, block_tokens=8)
    jax.block_until_ready((q_out3, k_out3))
    q_ref3, k_ref3 = _rope_reference(q3, k3, 2, 32)
    assert jnp.allclose(q_out3, q_ref3, atol=2e-4, rtol=2e-4)
    assert jnp.allclose(k_out3, k_ref3, atol=2e-4, rtol=2e-4)

    print("KERNEL_OK")
</pallas_src>

<mosaic_0001>
module attributes {stable_mosaic.version = 11 : i64} {
  func.func @_rope_kernel(%arg0: i32, %arg1: i32, %arg2: memref<2xi32, #tpu.memory_space<smem>>, %arg3: memref<1x64xf32, #tpu.memory_space<vmem>>, %arg4: memref<1x64xf32, #tpu.memory_space<vmem>>, %arg5: memref<1x8x4x64xf32, #tpu.memory_space<vmem>>, %arg6: memref<1x8x4x64xf32, #tpu.memory_space<vmem>>, %arg7: memref<1x8x4x64xf32, #tpu.memory_space<vmem>>, %arg8: memref<1x8x4x64xf32, #tpu.memory_space<vmem>>) attributes {dimension_semantics = [#tpu.dimension_semantics<parallel>, #tpu.dimension_semantics<parallel>], iteration_bounds = array<i64: 2, 1>, scalar_prefetch = 1 : i64, scratch_operands = 0 : i64, tpu.core_type = #tpu.core_type<tc>, window_params = [{pipeline_mode = #tpu.pipeline_mode<synchronous>, transform_indices = @transform_0, window_bounds = array<i64: 1, 64>}, {pipeline_mode = #tpu.pipeline_mode<synchronous>, transform_indices = @transform_1, window_bounds = array<i64: 1, 64>}, {transform_indices = @transform_2, window_bounds = array<i64: 1, 8, 4, 64>}, {transform_indices = @transform_3, window_bounds = array<i64: 1, 8, 4, 64>}, {transform_indices = @transform_4, window_bounds = array<i64: 1, 8, 4, 64>}, {transform_indices = @transform_5, window_bounds = array<i64: 1, 8, 4, 64>}]} {
    %0 = arith.index_cast %arg0 : i32 to index
    %1 = memref.load %arg2[%0] : memref<2xi32, #tpu.memory_space<smem>>
    %c8_i32 = arith.constant 8 : i32
    %2 = arith.muli %arg1, %c8_i32 : i32
    %3 = arith.addi %1, %2 : i32
    %4 = tpu.iota {dimensions = array<i32: 0>} : vector<8x1xi32>
    %5 = vector.broadcast %3 : i32 to vector<8x1xi32>
    %6 = arith.addi %5, %4 : vector<8x1xi32>
    %7 = arith.sitofp %6 : vector<8x1xi32> to vector<8x1xf32>
    %c0 = arith.constant 0 : index
    %c0_0 = arith.constant 0 : index
    %8 = vector.load %arg3[%c0, %c0_0] : memref<1x64xf32, #tpu.memory_space<vmem>>, vector<1x64xf32>
    %9 = vector.broadcast %7 : vector<8x1xf32> to vector<8x64xf32>
    %10 = vector.broadcast %8 : vector<1x64xf32> to vector<8x64xf32>
    %11 = arith.mulf %9, %10 : vector<8x64xf32>
    %12 = math.cos %11 : vector<8x64xf32>
    %13 = vector.shape_cast %12 : vector<8x64xf32> to vector<8x1x64xf32>
    %14 = math.sin %11 : vector<8x64xf32>
    %c0_1 = arith.constant 0 : index
    %c0_2 = arith.constant 0 : index
    %15 = vector.load %arg4[%c0_1, %c0_2] : memref<1x64xf32, #tpu.memory_space<vmem>>, vector<1x64xf32>
    %16 = vector.broadcast %15 : vector<1x64xf32> to vector<8x64xf32>
    %17 = arith.mulf %14, %16 : vector<8x64xf32>
    %18 = vector.shape_cast %17 : vector<8x64xf32> to vector<8x1x64xf32>
    %c0_3 = arith.constant 0 : index
    %c0_4 = arith.constant 0 : index
    %c0_5 = arith.constant 0 : index
    %c0_6 = arith.constant 0 : index
    %19 = vector.load %arg5[%c0_3, %c0_4, %c0_5, %c0_6] : memref<1x8x4x64xf32, #tpu.memory_space<vmem>>, vector<1x8x4x64xf32>
    %20 = vector.shape_cast %19 : vector<1x8x4x64xf32> to vector<8x4x64xf32>
    %21 = vector.extract_strided_slice %20 {offsets = [0, 0, 32], sizes = [8, 4, 32], strides = [1, 1, 1]} : vector<8x4x64xf32> to vector<8x4x32xf32>
    %22 = vector.extract_strided_slice %20 {offsets = [0, 0, 0], sizes = [8, 4, 32], strides = [1, 1, 1]} : vector<8x4x64xf32> to vector<8x4x32xf32>
    %23 = tpu.concatenate %21, %22 in 2 : vector<8x4x32xf32>, vector<8x4x32xf32> -> vector<8x4x64xf32>
    %24 = vector.broadcast %13 : vector<8x1x64xf32> to vector<8x4x64xf32>
    %25 = arith.mulf %20, %24 : vector<8x4x64xf32>
    %26 = vector.broadcast %18 : vector<8x1x64xf32> to vector<8x4x64xf32>
    %27 = arith.mulf %23, %26 : vector<8x4x64xf32>
    %28 = arith.addf %25, %27 : vector<8x4x64xf32>
    %c0_7 = arith.constant 0 : index
    %c0_8 = arith.constant 0 : index
    %c0_9 = arith.constant 0 : index
    %c0_10 = arith.constant 0 : index
    %29 = vector.load %arg7[%c0_7, %c0_8, %c0_9, %c0_10] : memref<1x8x4x64xf32, #tpu.memory_space<vmem>>, vector<1x8x4x64xf32>
    %30 = vector.shape_cast %29 : vector<1x8x4x64xf32> to vector<8x4x64xf32>
    %31 = vector.shape_cast %28 : vector<8x4x64xf32> to vector<1x8x4x64xf32>
    tpu.vector_store %arg7[%c0_7, %c0_8, %c0_9, %c0_10], %31 {strides = array<i32>} : memref<1x8x4x64xf32, #tpu.memory_space<vmem>>, vector<1x8x4x64xf32>,
    %c0_11 = arith.constant 0 : index
    %c0_12 = arith.constant 0 : index
    %c0_13 = arith.constant 0 : index
    %c0_14 = arith.constant 0 : index
    %32 = vector.load %arg6[%c0_11, %c0_12, %c0_13, %c0_14] : memref<1x8x4x64xf32, #tpu.memory_space<vmem>>, vector<1x8x4x64xf32>
    %33 = vector.shape_cast %32 : vector<1x8x4x64xf32> to vector<8x4x64xf32>
    %34 = vector.extract_strided_slice %33 {offsets = [0, 0, 32], sizes = [8, 4, 32], strides = [1, 1, 1]} : vector<8x4x64xf32> to vector<8x4x32xf32>
    %35 = vector.extract_strided_slice %33 {offsets = [0, 0, 0], sizes = [8, 4, 32], strides = [1, 1, 1]} : vector<8x4x64xf32> to vector<8x4x32xf32>
    %36 = tpu.concatenate %34, %35 in 2 : vector<8x4x32xf32>, vector<8x4x32xf32> -> vector<8x4x64xf32>
    %37 = vector.broadcast %13 : vector<8x1x64xf32> to vector<8x4x64xf32>
    %38 = arith.mulf %33, %37 : vector<8x4x64xf32>
    %39 = vector.broadcast %18 : vector<8x1x64xf32> to vector<8x4x64xf32>
    %40 = arith.mulf %36, %39 : vector<8x4x64xf32>
    %41 = arith.addf %38, %40 : vector<8x4x64xf32>
    %c0_15 = arith.constant 0 : index
    %c0_16 = arith.constant 0 : index
    %c0_17 = arith.constant 0 : index
    %c0_18 = arith.constant 0 : index
    %42 = vector.load %arg8[%c0_15, %c0_16, %c0_17, %c0_18] : memref<1x8x4x64xf32, #tpu.memory_space<vmem>>, vector<1x8x4x64xf32>
    %43 = vector.shape_cast %42 : vector<1x8x4x64xf32> to vector<8x4x64xf32>
    %44 = vector.shape_cast %41 : vector<8x4x64xf32> to vector<1x8x4x64xf32>
    tpu.vector_store %arg8[%c0_15, %c0_16, %c0_17, %c0_18], %44 {strides = array<i32>} : memref<1x8x4x64xf32, #tpu.memory_space<vmem>>, vector<1x8x4x64xf32>,
    return
  }
  func.func @transform_0(%arg0: i32, %arg1: i32, %arg2: memref<2xi32, #tpu.memory_space<smem>>) -> (i32, i32) {
    %c0_i32 = arith.constant 0 : i32
    %c0_i32_0 = arith.constant 0 : i32
    %c0_i32_1 = arith.constant 0 : i32
    return %c0_i32, %c0_i32_0 : i32, i32
  }
  func.func @transform_1(%arg0: i32, %arg1: i32, %arg2: memref<2xi32, #tpu.memory_space<smem>>) -> (i32, i32) {
    %c0_i32 = arith.constant 0 : i32
    %c0_i32_0 = arith.constant 0 : i32
    %c0_i32_1 = arith.constant 0 : i32
    return %c0_i32, %c0_i32_0 : i32, i32
  }
  func.func @transform_2(%arg0: i32, %arg1: i32, %arg2: memref<2xi32, #tpu.memory_space<smem>>) -> (i32, i32, i32, i32) {
    %c0_i32 = arith.constant 0 : i32
    %c0_i32_0 = arith.constant 0 : i32
    %c0_i32_1 = arith.constant 0 : i32
    return %arg0, %arg1, %c0_i32, %c0_i32_0 : i32, i32, i32, i32
  }
  func.func @transform_3(%arg0: i32, %arg1: i32, %arg2: memref<2xi32, #tpu.memory_space<smem>>) -> (i32, i32, i32, i32) {
    %c0_i32 = arith.constant 0 : i32
    %c0_i32_0 = arith.constant 0 : i32
    %c0_i32_1 = arith.constant 0 : i32
    return %arg0, %arg1, %c0_i32, %c0_i32_0 : i32, i32, i32, i32
  }
  func.func @transform_4(%arg0: i32, %arg1: i32, %arg2: memref<2xi32, #tpu.memory_space<smem>>) -> (i32, i32, i32, i32) {
    %c0_i32 = arith.constant 0 : i32
    %c0_i32_0 = arith.constant 0 : i32
    %c0_i32_1 = arith.constant 0 : i32
    return %arg0, %arg1, %c0_i32, %c0_i32_0 : i32, i32, i32, i32
  }
  func.func @transform_5(%arg0: i32, %arg1: i32, %arg2: memref<2xi32, #tpu.memory_space<smem>>) -> (i32, i32, i32, i32) {
    %c0_i32 = arith.constant 0 : i32
    %c0_i32_0 = arith.constant 0 : i32
    %c0_i32_1 = arith.constant 0 : i32
    return %arg0, %arg1, %c0_i32, %c0_i32_0 : i32, i32, i32, i32
  }
}

</mosaic_0001>

<llo_original>
// kernel: tpu_custom_call.1
$region0: #{tpu_custom_call.1}
  #allocation0 [shape = 'u32[]', space=smem, size = 0x4, offset = 0x4, fixed_abs, tag = 'smem constant byte address 0x4 - core index']
  #allocation1 [shape = 'u32[144,128]{1,0:T(1,128)}', space=vmem, size = 0x12000, scoped, tag = 'internal scratch']
  #allocation2 [shape = 's32[1]{0}', space=sflag, size = 0x4, scoped, tag = 'scoped memory for tpu_custom_call.1']
  #allocation3 [shape = 'u8[512]{0}', space=smem, size = 0x200, scoped, tag = 'prefetched SMEM operand 0']
  %s0 = inlined_call_operand.hbm [shape: s32[2], index: 0, kind: input, shape index: {}]
  %s1 = inlined_call_operand.vmem [shape: f32[1,64], index: 1, kind: input, shape index: {}]
  %s2 = inlined_call_operand.vmem [shape: f32[1,64], index: 2, kind: input, shape index: {}]
  %s3 = inlined_call_operand.hbm [shape: f32[2,8,4,64], index: 3, kind: input, shape index: {}]
  %s4 = inlined_call_operand.hbm [shape: f32[2,8,4,64], index: 4, kind: input, shape index: {}]
  %s5 = inlined_call_operand.hbm [shape: f32[2,8,4,64], index: 5, kind: output, shape index: {0}]
  %s6 = inlined_call_operand.hbm [shape: f32[2,8,4,64], index: 6, kind: output, shape index: {1}]
  %7 = xla_tuple %s5, %s6
  %s8 = sld [smem:[#allocation0]]
  $region65: #{tpu_custom_call.1} parent=0
    _
  %s10 = ssub.s32 1, %s8
  %s11 = scalar_select 0, %s10, %s8
  %13 = dma.hbm_to_smem %s0, 16, [#allocation3], [#allocation2]
  %14 = dma.done [#allocation2], 16
  %15 = sfence
  $region1: #{tpu_custom_call.1} parent=0
    #allocation4 [shape = 'u8[32768]{0}', space=vmem, size = 0x8000, scoped, tag = 'input window, operand 3']
    #allocation5 [shape = 's32[2]{0}', space=sflag, size = 0x8, scoped, tag = 'scoped memory for tpu_custom_call.1']
    #allocation6 [shape = 's32[2]{0}', space=sflag, size = 0x8, scoped, tag = 'scoped memory for tpu_custom_call.1']
    #allocation7 [shape = 'u8[32768]{0}', space=vmem, size = 0x8000, scoped, tag = 'input window, operand 4']
    #allocation8 [shape = 's32[2]{0}', space=sflag, size = 0x8, scoped, tag = 'scoped memory for tpu_custom_call.1']
    #allocation9 [shape = 'u8[32768]{0}', space=vmem, size = 0x8000, scoped, tag = 'output window, operand 0']
    #allocation10 [shape = 'u8[32768]{0}', space=vmem, size = 0x8000, scoped, tag = 'output window, operand 1']
    #allocation11 [shape = 's32[2]{0}', space=sflag, size = 0x8, scoped, tag = 'scoped memory for tpu_custom_call.1']
    %16 = vsyncpa [#allocation5], 0
    %s17 = scalar_lea.sflag [#allocation5], 1
    %18 = vsyncpa %s17, 0
    %19 = vsyncpa [#allocation8], 0
    %s20 = scalar_lea.sflag [#allocation8], 1
    %21 = vsyncpa %s20, 0
    %22 = vsyncpa [#allocation6], 0
    %s23 = scalar_lea.sflag [#allocation6], 1
    %24 = vsyncpa %s23, 0
    %25 = vsyncpa [#allocation11], 0
    %s26 = scalar_lea.sflag [#allocation11], 1
    %27 = vsyncpa %s26, 0
    loop: start=0, step=1, limit=4
    $region2: #{tpu_custom_call.1} parent=1 // loop_pre_header
      _
    $region3: #{tpu_custom_call.1} parent=1 // loop_header
      %s29 = sphi 0, %s33
      %p30 = scmp.ge.s32.totalorder %s29, 4
      %s36 = sphi 0, %s48
      %s37 = sphi 0, %s44
      %s38 = sphi 0, %s36
      %s39 = sphi 0, %s37
      %s40 = sphi 0, %s38
      %s41 = sphi 0, %s39
      %s49 = sphi 0, %s49
      %s51 = sphi 0, %s49
      %s52 = sphi 0, %s51
      %s66 = sphi 0, %s52
      %s70 = sphi 0, %s70
      %s72 = sphi 0, %s70
      %s73 = sphi 0, %s72
      %s87 = sphi 0, %s73
      %s95 = sphi 0, %s97
      %s98 = sphi 0, %s95
      %s99 = sphi 0, %s98
      %s115 = sphi 0, %s99
      %s123 = sphi 0, %s125
      %s126 = sphi 0, %s123
      %s127 = sphi 0, %s126
      %s143 = sphi 0, %s127
      %s151 = sphi 0, %s153
      %s154 = sphi 0, %s151
      %s155 = sphi 0, %s154
      %s171 = sphi 0, %s155
      %s179 = sphi 0, %s181
      %s182 = sphi 0, %s179
      %s183 = sphi 0, %s182
      %s199 = sphi 0, %s183
    $region4: #{tpu_custom_call.1} parent=1 // loop_header_branch
      %32 = sbr.rel (%p30) target = $region8
    $region5: #{tpu_custom_call.1} parent=1 // loop_body
      %s34 = ssub.s32 %s29, 1
      %s35 = ssub.s32 %s29, 2
      %s42 = sadd.s32 1, %s37
      %p43 = scmp.ge.s32.totalorder %s42, 1
      %s44 = scalar_select %p43, 0, %s42
      %s45 = sadd.s32 1, %s36
      %s46 = scalar_select %p43, %s45, %s36
      %p47 = scmp.ge.s32.totalorder %s46, 2
      %s48 = scalar_select %p47, 0, %s46
      %s50 = sadd.s32 %s49, 1
      %p53 = scmp.eq.s32.totalorder %s29, 1
      %p54 = scmp.ne.s32.totalorder %s49, %s51
      %p55 = scmp.eq.s32.totalorder %s29, 0
      %p56 = por %p54, %p55
      %p57 = scmp.ne.s32.totalorder %s49, %s51
      %p58 = scmp.eq.s32.totalorder %s34, 1
      %p59 = por %p57, %p58
      %p60 = scmp.ne.s32.totalorder %s51, %s52
      %p61 = scmp.eq.s32.totalorder %s34, 0
      %p62 = por %p60, %p61
      %p63 = scmp.ne.s32.totalorder %s51, %s52
      %p64 = scmp.eq.s32.totalorder %s35, 1
      %p65 = por %p63, %p64
      %p67 = scmp.ne.s32.totalorder %s52, %s66
      %p68 = scmp.eq.s32.totalorder %s35, 0
      %p69 = por %p67, %p68
      %s71 = sadd.s32 %s70, 1
      %p74 = scmp.eq.s32.totalorder %s29, 1
      %p75 = scmp.ne.s32.totalorder %s70, %s72
      %p76 = scmp.eq.s32.totalorder %s29, 0
      %p77 = por %p75, %p76
      %p78 = scmp.ne.s32.totalorder %s70, %s72
      %p79 = scmp.eq.s32.totalorder %s34, 1
      %p80 = por %p78, %p79
      %p81 = scmp.ne.s32.totalorder %s72, %s73
      %p82 = scmp.eq.s32.totalorder %s34, 0
      %p83 = por %p81, %p82
      %p84 = scmp.ne.s32.totalorder %s72, %s73
      %p85 = scmp.eq.s32.totalorder %s35, 1
      %p86 = por %p84, %p85
      %p88 = scmp.ne.s32.totalorder %s73, %s87
      %p89 = scmp.eq.s32.totalorder %s35, 0
      %p90 = por %p88, %p89
      %s91 = ssub.s32 %s36, %s48
      %s92 = ssub.s32 %s37, %s44
      %s93 = sor.u32 %s91, %s92
      %p94 = scmp.eq.s32.totalorder %s93, 0
      %s96 = sadd.s32 %s95, 1
      %s97 = scalar_select %p94, %s95, %s96
      %p100 = pneg %p94
      %p101 = scmp.eq.s32.totalorder %s29, 1
      %p102 = por %p100, %p101
      %p103 = scmp.ne.s32.totalorder %s95, %s98
      %p104 = scmp.eq.s32.totalorder %s29, 0
      %p105 = por %p103, %p104
      %p106 = scmp.ne.s32.totalorder %s95, %s98
      %p107 = scmp.eq.s32.totalorder %s34, 1
      %p108 = por %p106, %p107
      %p109 = scmp.ne.s32.totalorder %s98, %s99
      %p110 = scmp.eq.s32.totalorder %s34, 0
      %p111 = por %p109, %p110
      %p112 = scmp.ne.s32.totalorder %s98, %s99
      %p113 = scmp.eq.s32.totalorder %s35, 1
      %p114 = por %p112, %p113
      %p116 = scmp.ne.s32.totalorder %s99, %s115
      %p117 = scmp.eq.s32.totalorder %s35, 0
      %p118 = por %p116, %p117
      %s119 = ssub.s32 %s36, %s48
      %s120 = ssub.s32 %s37, %s44
      %s121 = sor.u32 %s119, %s120
      %p122 = scmp.eq.s32.totalorder %s121, 0
      %s124 = sadd.s32 %s123, 1
      %s125 = scalar_select %p122, %s123, %s124
      %p128 = pneg %p122
      %p129 = scmp.eq.s32.totalorder %s29, 1
      %p130 = por %p128, %p129
      %p131 = scmp.ne.s32.totalorder %s123, %s126
      %p132 = scmp.eq.s32.totalorder %s29, 0
      %p133 = por %p131, %p132
      %p134 = scmp.ne.s32.totalorder %s123, %s126
      %p135 = scmp.eq.s32.totalorder %s34, 1
      %p136 = por %p134, %p135
      %p137 = scmp.ne.s32.totalorder %s126, %s127
      %p138 = scmp.eq.s32.totalorder %s34, 0
      %p139 = por %p137, %p138
      %p140 = scmp.ne.s32.totalorder %s126, %s127
      %p141 = scmp.eq.s32.totalorder %s35, 1
      %p142 = por %p140, %p141
      %p144 = scmp.ne.s32.totalorder %s127, %s143
      %p145 = scmp.eq.s32.totalorder %s35, 0
      %p146 = por %p144, %p145
      %s147 = ssub.s32 %s36, %s48
      %s148 = ssub.s32 %s37, %s44
      %s149 = sor.u32 %s147, %s148
      %p150 = scmp.eq.s32.totalorder %s149, 0
      %s152 = sadd.s32 %s151, 1
      %s153 = scalar_select %p150, %s151, %s152
      %p156 = pneg %p150
      %p157 = scmp.eq.s32.totalorder %s29, 1
      %p158 = por %p156, %p157
      %p159 = scmp.ne.s32.totalorder %s151, %s154
      %p160 = scmp.eq.s32.totalorder %s29, 0
      %p161 = por %p159, %p160
      %p162 = scmp.ne.s32.totalorder %s151, %s154
      %p163 = scmp.eq.s32.totalorder %s34, 1
      %p164 = por %p162, %p163
      %p165 = scmp.ne.s32.totalorder %s154, %s155
      %p166 = scmp.eq.s32.totalorder %s34, 0
      %p167 = por %p165, %p166
      %p168 = scmp.ne.s32.totalorder %s154, %s155
      %p169 = scmp.eq.s32.totalorder %s35, 1
      %p170 = por %p168, %p169
      %p172 = scmp.ne.s32.totalorder %s155, %s171
      %p173 = scmp.eq.s32.totalorder %s35, 0
      %p174 = por %p172, %p173
      %s175 = ssub.s32 %s36, %s48
      %s176 = ssub.s32 %s37, %s44
      %s177 = sor.u32 %s175, %s176
      %p178 = scmp.eq.s32.totalorder %s177, 0
      %s180 = sadd.s32 %s179, 1
      %s181 = scalar_select %p178, %s179, %s180
      %p184 = pneg %p178
      %p185 = scmp.eq.s32.totalorder %s29, 1
      %p186 = por %p184, %p185
      %p187 = scmp.ne.s32.totalorder %s179, %s182
      %p188 = scmp.eq.s32.totalorder %s29, 0
      %p189 = por %p187, %p188
      %p190 = scmp.ne.s32.totalorder %s179, %s182
      %p191 = scmp.eq.s32.totalorder %s34, 1
      %p192 = por %p190, %p191
      %p193 = scmp.ne.s32.totalorder %s182, %s183
      %p194 = scmp.eq.s32.totalorder %s34, 0
      %p195 = por %p193, %p194
      %p196 = scmp.ne.s32.totalorder %s182, %s183
      %p197 = scmp.eq.s32.totalorder %s35, 1
      %p198 = por %p196, %p197
      %p200 = scmp.ne.s32.totalorder %s183, %s199
      %p201 = scmp.eq.s32.totalorder %s35, 0
      %p202 = por %p200, %p201
      %p203 = scmp.le.s32.totalorder 1, %s29
      %p204 = scmp.lt.s32.totalorder %s29, 3
      %p205 = pnand %p203, %p204
      %p206 = pneg %p205
      // Predicated region
      $region9: #{tpu_custom_call.1} parent=5 // pred_check
        _
      $region10: #{tpu_custom_call.1} parent=5 // pred_check_branch
        %208 = sbr.rel (%p205) target = $region12
      $region11: #{tpu_custom_call.1} parent=5 // pred_region
        %s209 = ssub.s32 %s29, 1
        // Predicated region
        $region13: #{tpu_custom_call.1} parent=11 // pred_check
          %p210 = pneg %p62
        $region14: #{tpu_custom_call.1} parent=11 // pred_check_branch
          %212 = sbr.rel (%p210) target = $region16
        $region15: #{tpu_custom_call.1} parent=11 // pred_region
          _
        $region16: #{tpu_custom_call.1} parent=11 // pred_fallthru
          _
        // Predicated region
        $region17: #{tpu_custom_call.1} parent=11 // pred_check
          %p213 = pneg %p83
        $region18: #{tpu_custom_call.1} parent=11 // pred_check_branch
          %215 = sbr.rel (%p213) target = $region20
        $region19: #{tpu_custom_call.1} parent=11 // pred_region
          _
        $region20: #{tpu_custom_call.1} parent=11 // pred_fallthru
          _
      $region12: #{tpu_custom_call.1} parent=5 // pred_fallthru
        _
      %p216 = scmp.lt.s32.totalorder %s29, 2
      // Predicated region
      $region21: #{tpu_custom_call.1} parent=5 // pred_check
        %p217 = pneg %p216
      $region22: #{tpu_custom_call.1} parent=5 // pred_check_branch
        %219 = sbr.rel (%p217) target = $region24
      $region23: #{tpu_custom_call.1} parent=5 // pred_region
        // Predicated region
        $region25: #{tpu_custom_call.1} parent=23 // pred_check
          %p220 = pneg %p105
        $region26: #{tpu_custom_call.1} parent=23 // pred_check_branch
          %222 = sbr.rel (%p220) target = $region28
        $region27: #{tpu_custom_call.1} parent=23 // pred_region
          %s223 = sand.u32 %s95, 1
          %s224 = scalar_lea.sflag [#allocation5], %s223
          %s225 = sand.u32 %s95, 1
          %s226 = smul.addr %s225, 32
          %s227 = scalar_lea.vmem [#allocation4], %s226
          %s228 = smul.u32 8, %s37
          %s230 = ssub.s32 512, 512
          %231 = vsyncadd %s224, %s230
          %s232 = smul.addr %s36, 8
          %s233 = sadd.s32 %s228, %s232
          %s234 = smul.addr %s233, 64
          %s235 = scalar_lea.hbm %s3, %s234
          %s236 = sshll.u32 %s227, 4
          %s237 = int_to_ptr.vmem [resolvable:$true] %s236
          %242 = dma.hbm_to_vmem [thread:$0]  %s235, 512, %s237, %s224, 64, 64, 4
        $region28: #{tpu_custom_call.1} parent=23 // pred_fallthru
          _
        // Predicated region
        $region29: #{tpu_custom_call.1} parent=23 // pred_check
          %p243 = pneg %p133
        $region30: #{tpu_custom_call.1} parent=23 // pred_check_branch
          %245 = sbr.rel (%p243) target = $region32
        $region31: #{tpu_custom_call.1} parent=23 // pred_region
          %s246 = sand.u32 %s123, 1
          %s247 = scalar_lea.sflag [#allocation8], %s246
          %s248 = sand.u32 %s123, 1
          %s249 = smul.addr %s248, 32
          %s250 = scalar_lea.vmem [#allocation7], %s249
          %s251 = smul.u32 8, %s37
          %s253 = ssub.s32 512, 512
          %254 = vsyncadd %s247, %s253
          %s255 = smul.addr %s36, 8
          %s256 = sadd.s32 %s251, %s255
          %s257 = smul.addr %s256, 64
          %s258 = scalar_lea.hbm %s4, %s257
          %s259 = sshll.u32 %s250, 4
          %s260 = int_to_ptr.vmem [resolvable:$true] %s259
          %265 = dma.hbm_to_vmem [thread:$0]  %s258, 512, %s260, %s247, 64, 64, 4
        $region32: #{tpu_custom_call.1} parent=23 // pred_fallthru
          _
      $region24: #{tpu_custom_call.1} parent=5 // pred_fallthru
        _
      %p266 = scmp.le.s32.totalorder 1, %s29
      %p267 = scmp.lt.s32.totalorder %s29, 3
      %p268 = pnand %p266, %p267
      %p269 = pneg %p268
      // Predicated region
      $region33: #{tpu_custom_call.1} parent=5 // pred_check
        _
      $region34: #{tpu_custom_call.1} parent=5 // pred_check_branch
        %271 = sbr.rel (%p268) target = $region36
      $region35: #{tpu_custom_call.1} parent=5 // pred_region
        %s272 = ssub.s32 %s29, 1
        %s273 = sand.u32 %s98, 1
        %s274 = scalar_lea.sflag [#allocation5], %s273
        %s275 = sand.u32 %s98, 1
        %s276 = smul.addr %s275, 32
        %s277 = scalar_lea.vmem [#allocation4], %s276
        // Predicated region
        $region37: #{tpu_custom_call.1} parent=35 // pred_check
          %p278 = pneg %p111
        $region38: #{tpu_custom_call.1} parent=35 // pred_check_branch
          %280 = sbr.rel (%p278) target = $region40
        $region39: #{tpu_custom_call.1} parent=35 // pred_region
          %281 = dma.done %s274, 512
        $region40: #{tpu_custom_call.1} parent=35 // pred_fallthru
          _
        %s282 = sand.u32 %s126, 1
        %s283 = scalar_lea.sflag [#allocation8], %s282
        %s284 = sand.u32 %s126, 1
        %s285 = smul.addr %s284, 32
        %s286 = scalar_lea.vmem [#allocation7], %s285
        // Predicated region
        $region41: #{tpu_custom_call.1} parent=35 // pred_check
          %p287 = pneg %p139
        $region42: #{tpu_custom_call.1} parent=35 // pred_check_branch
          %289 = sbr.rel (%p287) target = $region44
        $region43: #{tpu_custom_call.1} parent=35 // pred_region
          %290 = dma.done %s283, 512
        $region44: #{tpu_custom_call.1} parent=35 // pred_fallthru
          _
        %p291 = pneg %p62
        %p292 = pneg %p59
        %p293 = pneg %p83
        %p294 = pneg %p80
        %s295 = sand.u32 %s98, 1
        %s296 = scalar_lea.sflag [#allocation5], %s295
        %s297 = sand.u32 %s98, 1
        %s298 = smul.addr %s297, 32
        %s299 = scalar_lea.vmem [#allocation4], %s298
        %p300 = pneg %p111
        %p301 = pneg %p108
        %s302 = sand.u32 %s126, 1
        %s303 = scalar_lea.sflag [#allocation8], %s302
        %s304 = sand.u32 %s126, 1
        %s305 = smul.addr %s304, 32
        %s306 = scalar_lea.vmem [#allocation7], %s305
        %p307 = pneg %p139
        %p308 = pneg %p136
        %p309 = pneg %p167
        %p310 = pneg %p164
        %s311 = sand.u32 %s154, 1
        %s312 = scalar_lea.sflag [#allocation6], %s311
        %s313 = sand.u32 %s154, 1
        %s314 = smul.addr %s313, 32
        %s315 = scalar_lea.vmem [#allocation9], %s314
        %p316 = pneg %p195
        %p317 = pneg %p192
        %s318 = sand.u32 %s182, 1
        %s319 = scalar_lea.sflag [#allocation11], %s318
        %s320 = sand.u32 %s182, 1
        %s321 = smul.addr %s320, 32
        %s322 = scalar_lea.vmem [#allocation10], %s321
        %s323 = smul.u32 8, %s39
        %s324 = smul.u32 8, %s39
        %s325 = smul.u32 8, %s39
        %s326 = smul.u32 8, %s39
        %s327 = sld [smem:[#allocation3 + %s38]]
        %s328 = smul.u32 %s39, 8
        %s329 = sadd.s32 %s327, %s328
        %v330 = vlaneseq
        %v331 = vshrl.u32 %v330, 7
        %v332 = vstv %s329
        %v333 = vadd.s32 %v332, %v331
        %v334 = vcvt.s32.f32 %v333
        %v335 = vld [vmem:[%s1] sm:$0x1]
        %v337 = vlaneseq
        %v338 = vshrl.u32 %v337, 7
        %v339 = vsub.s32 0, %v338
        %v340 = vrot.slane %v335, %v339
        %v342 = vmul.f32 %v334, %v340
        %v343 = vand.u32 2147483647, %v342
        %vm344 = vcmp.le.f32.partialorder %v343, 0.7853982
        %vm345 = vcmp.lt.s32.totalorder %v342, 0
        %v346 = vand.u32 %v342, 2139095040
        %v347 = vshrl.u32 %v346, 23
        %v348 = vsub.s32 %v347, 127
        %v349 = vand.u32 2147483647, %v342
        %v350 = vand.u32 %v349, 8388607
        %v351 = vor.u32 %v350, 8388608
        %v352 = vsub.s32 0, %v351
        %v353 = vadd.s32 %v348, 1
        %vm354 = vcmp.gt.s32.totalorder %v353, 0
        %v355 = vsel %vm354, %v353, 0
        %v356 = vshrl.u32 %v355, 5
        %v357 = vand.u32 %v355, 31
        %v358 = vsub.s32 32, %v357
        %v359 = vshrl.u32 683565275, %v358
        %v360 = vshll.u32 683565275, %v357
        %v361 = vshrl.u32 2475754826, %v358
        %v362 = vor.u32 %v360, %v361
        %v363 = vshll.u32 2475754826, %v357
        %v364 = vshrl.u32 2131351028, %v358
        %v365 = vor.u32 %v363, %v364
        %v366 = vshll.u32 2131351028, %v357
        %v367 = vshrl.u32 2102212464, %v358
        %v368 = vor.u32 %v366, %v367
        %v369 = vshll.u32 2102212464, %v357
        %v370 = vshrl.u32 920167782, %v358
        %v371 = vor.u32 %v369, %v370
        %v372 = vshll.u32 920167782, %v357
        %v373 = vshrl.u32 1326507024, %v358
        %v374 = vor.u32 %v372, %v373
        %vm375 = vcmp.lt.s32.totalorder %v356, 1
        %vm376 = vcmp.lt.s32.totalorder %v356, 2
        %vm377 = vcmp.lt.s32.totalorder %v356, 3
        %vm378 = vcmp.lt.s32.totalorder %v356, 4
        %v379 = vsel %vm375, %v359, %v362
        %v380 = vsel %vm378, %v368, 2102212464
        %v381 = vsel %vm377, %v365, %v380
        %v382 = vsel %vm376, %v379, %v381
        %v383 = vsel %vm375, %v362, %v365
        %v384 = vsel %vm378, %v371, 920167782
        %v385 = vsel %vm377, %v368, %v384
        %v386 = vsel %vm376, %v383, %v385
        %v387 = vsel %vm375, %v365, %v368
        %v388 = vsel %vm378, %v374, 1326507024
        %v389 = vsel %vm377, %v371, %v388
        %v390 = vsel %vm376, %v387, %v389
        %v391 = vshll.u32 %v351, 8
        %v392 = vmul.u32.u64.compose %v391, %v390
        %v393 = vextract.low.u32 %v392
        %v394 = vextract.high.u32 %v392
        %v395 = vmul.u32.u64.compose %v391, %v386
        %v396 = vextract.low.u32 %v395
        %v397 = vextract.high.u32 %v395
        %v398 = vmul.u32 %v391, %v382
        %v399 = vadd.s32 %v394, %v396
        %vm400 = vc.u32 %v394, %v396
        %v401 = vadd.s32 %v397, 1
        %v402 = vsel %vm400, %v401, %v397
        %v403 = vadd.s32 %v398, %v402
        %v404 = vadd.s32 %v403, 536870912
        %v405 = vshrl.u32 %v404, 30
        %v406 = vshll.u32 %v405, 30
        %v407 = vsub.s32 %v403, %v406
        %vm408 = vcmp.lt.s32.totalorder %v407, 0
        %v409 = vsub.s32 0, %v407
        %v410 = vsel %vm408, %v409, %v407
        %v411 = vclz %v410
        %v412 = vsub.s32 %v411, 2
        %vm413 = vcmp.gt.s32.totalorder 0, %v412
        %v414 = vsel %vm413, 0, %v412
        %v415 = vsub.s32 32, %v414
        %v416 = vshll.u32 %v407, %v414
        %v417 = vshrl.u32 %v399, %v415
        %v418 = vor.u32 %v416, %v417
        %v419 = vsub.s32 4294967266, %v414
        %v420 = vadd.s32 %v419, 127
        %v421 = vshll.u32 %v420, 23
        %v422 = vor.u32 4788187, %v421
        %v423 = vand.u32 2147483647, %v422
        %v425 = vcvt.s32.f32 %v418
        %v426 = vmul.f32 %v425, %v423
        %v427 = vxor.u32 %v426, 2147483648
        %v428 = vsel %vm345, %v427, %v426
        %v429 = vsub.s32 4, %v405
        %v430 = vsel %vm345, %v429, %v405
        %v431 = vsel %vm344, %v342, %v428
        %v432 = vsel %vm344, 0, %v430
        %v433 = vcosq.f32.pop %v431
        %v434 = vsinq.f32.pop %v431
        %vm435 = vweird.f32 %v342
        %v436 = vand.u32 %v432, 3
        %vm437 = vcmp.lt.s32.totalorder %v436, 2
        %vm438 = vcmp.eq.s32.totalorder %v436, 0
        %v439 = vxor.u32 %v434, 2147483648
        %v440 = vsel %vm438, %v433, %v439
        %vm441 = vcmp.eq.s32.totalorder %v436, 2
        %v442 = vxor.u32 %v433, 2147483648
        %v443 = vsel %vm441, %v442, %v434
        %v444 = vsel %vm437, %v440, %v443
        %v445 = vsel %vm435, nan, %v444
        %v447 = vcombine.high %v445, %v445
        %v449 = vunpack.c.l.s4 1966171168
        %v450 = vunpack.c.0.s8 %v449
        %v451 = vlaneseq
        %v452 = vshrl.u32 %v451, 7
        %v453 = vsub.s32 %v450, %v452
        %v454 = vrot.slane %v445, %v453
        %v456 = vunpack.c.l.s4 1966171168
        %v457 = vunpack.c.0.s8 %v456
        %v458 = vlaneseq
        %v459 = vshrl.u32 %v458, 7
        %v460 = vsub.s32 %v457, %v459
        %v461 = vrot.slane %v447, %v460
        %v462 = vcombine.high %v454, %v454
        %v463 = vcombine.high %v461, %v461
        %v465 = vunpack.c.l.s4 1966171168
        %v466 = vunpack.c.0.s8 %v465
        %v467 = vlaneseq
        %v468 = vshrl.u32 %v467, 7
        %v469 = vsub.s32 %v466, %v468
        %v470 = vrot.slane %v454, %v469
        %v472 = vunpack.c.l.s4 1966171168
        %v473 = vunpack.c.0.s8 %v472
        %v474 = vlaneseq
        %v475 = vshrl.u32 %v474, 7
        %v476 = vsub.s32 %v473, %v475
        %v477 = vrot.slane %v461, %v476
        %v479 = vunpack.c.l.s4 1966171168
        %v480 = vunpack.c.0.s8 %v479
        %v481 = vlaneseq
        %v482 = vshrl.u32 %v481, 7
        %v483 = vsub.s32 %v480, %v482
        %v484 = vrot.slane %v462, %v483
        %v486 = vunpack.c.l.s4 1966171168
        %v487 = vunpack.c.0.s8 %v486
        %v488 = vlaneseq
        %v489 = vshrl.u32 %v488, 7
        %v490 = vsub.s32 %v487, %v489
        %v491 = vrot.slane %v463, %v490
        %v492 = vcombine.high %v470, %v470
        %v493 = vcombine.high %v477, %v477
        %v494 = vcombine.high %v484, %v484
        %v495 = vcombine.high %v491, %v491
        %v496 = vand.u32 2147483647, %v342
        %vm497 = vcmp.le.f32.partialorder %v496, 0.7853982
        %vm498 = vcmp.lt.s32.totalorder %v342, 0
        %v499 = vand.u32 %v342, 2139095040
        %v500 = vshrl.u32 %v499, 23
        %v501 = vsub.s32 %v500, 127
        %v502 = vand.u32 2147483647, %v342
        %v503 = vand.u32 %v502, 8388607
        %v504 = vor.u32 %v503, 8388608
        %v505 = vsub.s32 0, %v504
        %v506 = vadd.s32 %v501, 1
        %vm507 = vcmp.gt.s32.totalorder %v506, 0
        %v508 = vsel %vm507, %v506, 0
        %v509 = vshrl.u32 %v508, 5
        %v510 = vand.u32 %v508, 31
        %v511 = vsub.s32 32, %v510
        %v512 = vshrl.u32 683565275, %v511
        %v513 = vshll.u32 683565275, %v510
        %v514 = vshrl.u32 2475754826, %v511
        %v515 = vor.u32 %v513, %v514
        %v516 = vshll.u32 2475754826, %v510
        %v517 = vshrl.u32 2131351028, %v511
        %v518 = vor.u32 %v516, %v517
        %v519 = vshll.u32 2131351028, %v510
        %v520 = vshrl.u32 2102212464, %v511
        %v521 = vor.u32 %v519, %v520
        %v522 = vshll.u32 2102212464, %v510
        %v523 = vshrl.u32 920167782, %v511
        %v524 = vor.u32 %v522, %v523
        %v525 = vshll.u32 920167782, %v510
        %v526 = vshrl.u32 1326507024, %v511
        %v527 = vor.u32 %v525, %v526
        %vm528 = vcmp.lt.s32.totalorder %v509, 1
        %vm529 = vcmp.lt.s32.totalorder %v509, 2
        %vm530 = vcmp.lt.s32.totalorder %v509, 3
        %vm531 = vcmp.lt.s32.totalorder %v509, 4
        %v532 = vsel %vm528, %v512, %v515
        %v533 = vsel %vm531, %v521, 2102212464
        %v534 = vsel %vm530, %v518, %v533
        %v535 = vsel %vm529, %v532, %v534
        %v536 = vsel %vm528, %v515, %v518
        %v537 = vsel %vm531, %v524, 920167782
        %v538 = vsel %vm530, %v521, %v537
        %v539 = vsel %vm529, %v536, %v538
        %v540 = vsel %vm528, %v518, %v521
        %v541 = vsel %vm531, %v527, 1326507024
        %v542 = vsel %vm530, %v524, %v541
        %v543 = vsel %vm529, %v540, %v542
        %v544 = vshll.u32 %v504, 8
        %v545 = vmul.u32.u64.compose %v544, %v543
        %v546 = vextract.low.u32 %v545
        %v547 = vextract.high.u32 %v545
        %v548 = vmul.u32.u64.compose %v544, %v539
        %v549 = vextract.low.u32 %v548
        %v550 = vextract.high.u32 %v548
        %v551 = vmul.u32 %v544, %v535
        %v552 = vadd.s32 %v547, %v549
        %vm553 = vc.u32 %v547, %v549
        %v554 = vadd.s32 %v550, 1
        %v555 = vsel %vm553, %v554, %v550
        %v556 = vadd.s32 %v551, %v555
        %v557 = vadd.s32 %v556, 536870912
        %v558 = vshrl.u32 %v557, 30
        %v559 = vshll.u32 %v558, 30
        %v560 = vsub.s32 %v556, %v559
        %vm561 = vcmp.lt.s32.totalorder %v560, 0
        %v562 = vsub.s32 0, %v560
        %v563 = vsel %vm561, %v562, %v560
        %v564 = vclz %v563
        %v565 = vsub.s32 %v564, 2
        %vm566 = vcmp.gt.s32.totalorder 0, %v565
        %v567 = vsel %vm566, 0, %v565
        %v568 = vsub.s32 32, %v567
        %v569 = vshll.u32 %v560, %v567
        %v570 = vshrl.u32 %v552, %v568
        %v571 = vor.u32 %v569, %v570
        %v572 = vsub.s32 4294967266, %v567
        %v573 = vadd.s32 %v572, 127
        %v574 = vshll.u32 %v573, 23
        %v575 = vor.u32 4788187, %v574
        %v576 = vand.u32 2147483647, %v575
        %v578 = vcvt.s32.f32 %v571
        %v579 = vmul.f32 %v578, %v576
        %v580 = vxor.u32 %v579, 2147483648
        %v581 = vsel %vm498, %v580, %v579
        %v582 = vsub.s32 4, %v558
        %v583 = vsel %vm498, %v582, %v558
        %v584 = vsel %vm497, %v342, %v581
        %v585 = vsel %vm497, 0, %v583
        %v586 = vcosq.f32.pop %v584
        %v587 = vsinq.f32.pop %v584
        %vm588 = vweird.f32 %v342
        %v589 = vadd.s32 %v585, 3
        %v590 = vand.u32 %v589, 3
        %vm591 = vcmp.lt.s32.totalorder %v590, 2
        %vm592 = vcmp.eq.s32.totalorder %v590, 0
        %v593 = vxor.u32 %v587, 2147483648
        %v594 = vsel %vm592, %v586, %v593
        %vm595 = vcmp.eq.s32.totalorder %v590, 2
        %v596 = vxor.u32 %v586, 2147483648
        %v597 = vsel %vm595, %v596, %v587
        %v598 = vsel %vm591, %v594, %v597
        %v599 = vsel %vm588, nan, %v598
        %v600 = vld [vmem:[%s2] sm:$0x1]
        %v602 = vlaneseq
        %v603 = vshrl.u32 %v602, 7
        %v604 = vsub.s32 0, %v603
        %v605 = vrot.slane %v600, %v604
        %v607 = vmul.f32 %v599, %v605
        %v609 = vcombine.high %v607, %v607
        %v611 = vunpack.c.l.s4 1966171168
        %v612 = vunpack.c.0.s8 %v611
        %v613 = vlaneseq
        %v614 = vshrl.u32 %v613, 7
        %v615 = vsub.s32 %v612, %v614
        %v616 = vrot.slane %v607, %v615
        %v618 = vunpack.c.l.s4 1966171168
        %v619 = vunpack.c.0.s8 %v618
        %v620 = vlaneseq
        %v621 = vshrl.u32 %v620, 7
        %v622 = vsub.s32 %v619, %v621
        %v623 = vrot.slane %v609, %v622
        %v624 = vcombine.high %v616, %v616
        %v625 = vcombine.high %v623, %v623
        %v627 = vunpack.c.l.s4 1966171168
        %v628 = vunpack.c.0.s8 %v627
        %v629 = vlaneseq
        %v630 = vshrl.u32 %v629, 7
        %v631 = vsub.s32 %v628, %v630
        %v632 = vrot.slane %v616, %v631
        %v634 = vunpack.c.l.s4 1966171168
        %v635 = vunpack.c.0.s8 %v634
        %v636 = vlaneseq
        %v637 = vshrl.u32 %v636, 7
        %v638 = vsub.s32 %v635, %v637
        %v639 = vrot.slane %v623, %v638
        %v641 = vunpack.c.l.s4 1966171168
        %v642 = vunpack.c.0.s8 %v641
        %v643 = vlaneseq
        %v644 = vshrl.u32 %v643, 7
        %v645 = vsub.s32 %v642, %v644
        %v646 = vrot.slane %v624, %v645
        %v648 = vunpack.c.l.s4 1966171168
        %v649 = vunpack.c.0.s8 %v648
        %v650 = vlaneseq
        %v651 = vshrl.u32 %v650, 7
        %v652 = vsub.s32 %v649, %v651
        %v653 = vrot.slane %v625, %v652
        %v654 = vcombine.high %v632, %v632
        %v655 = vcombine.high %v639, %v639
        %v656 = vcombine.high %v646, %v646
        %v657 = vcombine.high %v653, %v653
        %v658 = vld [vmem:[%s277] sm:$0xf]
        %v659 = vld [vmem:[%s277 + $0x4] sm:$0xf]
        %v660 = vld [vmem:[%s277 + $0x8] sm:$0xf]
        %v661 = vld [vmem:[%s277 + $0xc] sm:$0xf]
        %v662 = vld [vmem:[%s277 + $0x10] sm:$0xf]
        %v663 = vld [vmem:[%s277 + $0x14] sm:$0xf]
        %v664 = vld [vmem:[%s277 + $0x18] sm:$0xf]
        %v665 = vld [vmem:[%s277 + $0x1c] sm:$0xf]
        %674 = vrot.lane.b32.xlu0 %v658, 96
        %v675 = vpop.permute.xlu0 %674
        %676 = vrot.lane.b32.xlu0 %v659, 96
        %v677 = vpop.permute.xlu0 %676
        %678 = vrot.lane.b32.xlu0 %v660, 96
        %v679 = vpop.permute.xlu0 %678
        %680 = vrot.lane.b32.xlu0 %v661, 96
        %v681 = vpop.permute.xlu0 %680
        %682 = vrot.lane.b32.xlu0 %v662, 96
        %v683 = vpop.permute.xlu0 %682
        %684 = vrot.lane.b32.xlu0 %v663, 96
        %v685 = vpop.permute.xlu0 %684
        %686 = vrot.lane.b32.xlu0 %v664, 96
        %v687 = vpop.permute.xlu0 %686
        %688 = vrot.lane.b32.xlu0 %v665, 96
        %v689 = vpop.permute.xlu0 %688
        %698 = vrot.lane.b32.xlu0 %v658, 32
        %v699 = vpop.permute.xlu0 %698
        %700 = vrot.lane.b32.xlu0 %v659, 32
        %v701 = vpop.permute.xlu0 %700
        %702 = vrot.lane.b32.xlu0 %v660, 32
        %v703 = vpop.permute.xlu0 %702
        %704 = vrot.lane.b32.xlu0 %v661, 32
        %v705 = vpop.permute.xlu0 %704
        %706 = vrot.lane.b32.xlu0 %v662, 32
        %v707 = vpop.permute.xlu0 %706
        %708 = vrot.lane.b32.xlu0 %v663, 32
        %v709 = vpop.permute.xlu0 %708
        %710 = vrot.lane.b32.xlu0 %v664, 32
        %v711 = vpop.permute.xlu0 %710
        %712 = vrot.lane.b32.xlu0 %v665, 32
        %v713 = vpop.permute.xlu0 %712
        %vm722 = vcmask 261120
        %v723 = vsel %vm722, %v675, %v699
        %v724 = vsel %vm722, %v677, %v701
        %v725 = vsel %vm722, %v679, %v703
        %v726 = vsel %vm722, %v681, %v705
        %v727 = vsel %vm722, %v683, %v707
        %v728 = vsel %vm722, %v685, %v709
        %v729 = vsel %vm722, %v687, %v711
        %v730 = vsel %vm722, %v689, %v713
        %v731 = vlaneseq
        %v732 = vshrl.u32 %v731, 7
        %v733 = vsub.s32 0, %v732
        %v734 = vrot.slane %v470, %v733
        %v735 = vlaneseq
        %v736 = vshrl.u32 %v735, 7
        %v737 = vsub.s32 0, %v736
        %v738 = vrot.slane %v484, %v737
        %v739 = vlaneseq
        %v740 = vshrl.u32 %v739, 7
        %v741 = vsub.s32 0, %v740
        %v742 = vrot.slane %v492, %v741
        %v743 = vlaneseq
        %v744 = vshrl.u32 %v743, 7
        %v745 = vsub.s32 0, %v744
        %v746 = vrot.slane %v494, %v745
        %v747 = vlaneseq
        %v748 = vshrl.u32 %v747, 7
        %v749 = vsub.s32 0, %v748
        %v750 = vrot.slane %v477, %v749
        %v751 = vlaneseq
        %v752 = vshrl.u32 %v751, 7
        %v753 = vsub.s32 0, %v752
        %v754 = vrot.slane %v491, %v753
        %v755 = vlaneseq
        %v756 = vshrl.u32 %v755, 7
        %v757 = vsub.s32 0, %v756
        %v758 = vrot.slane %v493, %v757
        %v759 = vlaneseq
        %v760 = vshrl.u32 %v759, 7
        %v761 = vsub.s32 0, %v760
        %v762 = vrot.slane %v495, %v761
        %v771 = vmul.f32 %v658, %v734
        %v772 = vmul.f32 %v659, %v738
        %v773 = vmul.f32 %v660, %v742
        %v774 = vmul.f32 %v661, %v746
        %v775 = vmul.f32 %v662, %v750
        %v776 = vmul.f32 %v663, %v754
        %v777 = vmul.f32 %v664, %v758
        %v778 = vmul.f32 %v665, %v762
        %v779 = vlaneseq
        %v780 = vshrl.u32 %v779, 7
        %v781 = vsub.s32 0, %v780
        %v782 = vrot.slane %v632, %v781
        %v783 = vlaneseq
        %v784 = vshrl.u32 %v783, 7
        %v785 = vsub.s32 0, %v784
        %v786 = vrot.slane %v646, %v785
        %v787 = vlaneseq
        %v788 = vshrl.u32 %v787, 7
        %v789 = vsub.s32 0, %v788
        %v790 = vrot.slane %v654, %v789
        %v791 = vlaneseq
        %v792 = vshrl.u32 %v791, 7
        %v793 = vsub.s32 0, %v792
        %v794 = vrot.slane %v656, %v793
        %v795 = vlaneseq
        %v796 = vshrl.u32 %v795, 7
        %v797 = vsub.s32 0, %v796
        %v798 = vrot.slane %v639, %v797
        %v799 = vlaneseq
        %v800 = vshrl.u32 %v799, 7
        %v801 = vsub.s32 0, %v800
        %v802 = vrot.slane %v653, %v801
        %v803 = vlaneseq
        %v804 = vshrl.u32 %v803, 7
        %v805 = vsub.s32 0, %v804
        %v806 = vrot.slane %v655, %v805
        %v807 = vlaneseq
        %v808 = vshrl.u32 %v807, 7
        %v809 = vsub.s32 0, %v808
        %v810 = vrot.slane %v657, %v809
        %v819 = vmul.f32 %v723, %v782
        %v820 = vmul.f32 %v724, %v786
        %v821 = vmul.f32 %v725, %v790
        %v822 = vmul.f32 %v726, %v794
        %v823 = vmul.f32 %v727, %v798
        %v824 = vmul.f32 %v728, %v802
        %v825 = vmul.f32 %v729, %v806
        %v826 = vmul.f32 %v730, %v810
        %v827 = vadd.f32 %v771, %v819
        %v828 = vadd.f32 %v772, %v820
        %v829 = vadd.f32 %v773, %v821
        %v830 = vadd.f32 %v774, %v822
        %v831 = vadd.f32 %v775, %v823
        %v832 = vadd.f32 %v776, %v824
        %v833 = vadd.f32 %v777, %v825
        %v834 = vadd.f32 %v778, %v826
        %vm835 = vcmask 519168
        %836 = vst.msk [vmem:[%s315] sm:$0xf] %vm835, %v827
        %837 = vst.msk [vmem:[%s315 + $0x4] sm:$0xf] %vm835, %v828
        %838 = vst.msk [vmem:[%s315 + $0x8] sm:$0xf] %vm835, %v829
        %839 = vst.msk [vmem:[%s315 + $0xc] sm:$0xf] %vm835, %v830
        %840 = vst.msk [vmem:[%s315 + $0x10] sm:$0xf] %vm835, %v831
        %841 = vst.msk [vmem:[%s315 + $0x14] sm:$0xf] %vm835, %v832
        %842 = vst.msk [vmem:[%s315 + $0x18] sm:$0xf] %vm835, %v833
        %843 = vst.msk [vmem:[%s315 + $0x1c] sm:$0xf] %vm835, %v834
        %v844 = vld [vmem:[%s286] sm:$0xf]
        %v845 = vld [vmem:[%s286 + $0x4] sm:$0xf]
        %v846 = vld [vmem:[%s286 + $0x8] sm:$0xf]
        %v847 = vld [vmem:[%s286 + $0xc] sm:$0xf]
        %v848 = vld [vmem:[%s286 + $0x10] sm:$0xf]
        %v849 = vld [vmem:[%s286 + $0x14] sm:$0xf]
        %v850 = vld [vmem:[%s286 + $0x18] sm:$0xf]
        %v851 = vld [vmem:[%s286 + $0x1c] sm:$0xf]
        %860 = vrot.lane.b32.xlu0 %v844, 96
        %v861 = vpop.permute.xlu0 %860
        %862 = vrot.lane.b32.xlu0 %v845, 96
        %v863 = vpop.permute.xlu0 %862
        %864 = vrot.lane.b32.xlu0 %v846, 96
        %v865 = vpop.permute.xlu0 %864
        %866 = vrot.lane.b32.xlu0 %v847, 96
        %v867 = vpop.permute.xlu0 %866
        %868 = vrot.lane.b32.xlu0 %v848, 96
        %v869 = vpop.permute.xlu0 %868
        %870 = vrot.lane.b32.xlu0 %v849, 96
        %v871 = vpop.permute.xlu0 %870
        %872 = vrot.lane.b32.xlu0 %v850, 96
        %v873 = vpop.permute.xlu0 %872
        %874 = vrot.lane.b32.xlu0 %v851, 96
        %v875 = vpop.permute.xlu0 %874
        %884 = vrot.lane.b32.xlu0 %v844, 32
        %v885 = vpop.permute.xlu0 %884
        %886 = vrot.lane.b32.xlu0 %v845, 32
        %v887 = vpop.permute.xlu0 %886
        %888 = vrot.lane.b32.xlu0 %v846, 32
        %v889 = vpop.permute.xlu0 %888
        %890 = vrot.lane.b32.xlu0 %v847, 32
        %v891 = vpop.permute.xlu0 %890
        %892 = vrot.lane.b32.xlu0 %v848, 32
        %v893 = vpop.permute.xlu0 %892
        %894 = vrot.lane.b32.xlu0 %v849, 32
        %v895 = vpop.permute.xlu0 %894
        %896 = vrot.lane.b32.xlu0 %v850, 32
        %v897 = vpop.permute.xlu0 %896
        %898 = vrot.lane.b32.xlu0 %v851, 32
        %v899 = vpop.permute.xlu0 %898
        %v908 = vsel %vm722, %v861, %v885
        %v909 = vsel %vm722, %v863, %v887
        %v910 = vsel %vm722, %v865, %v889
        %v911 = vsel %vm722, %v867, %v891
        %v912 = vsel %vm722, %v869, %v893
        %v913 = vsel %vm722, %v871, %v895
        %v914 = vsel %vm722, %v873, %v897
        %v915 = vsel %vm722, %v875, %v899
        %v916 = vmul.f32 %v844, %v734
        %v917 = vmul.f32 %v845, %v738
        %v918 = vmul.f32 %v846, %v742
        %v919 = vmul.f32 %v847, %v746
        %v920 = vmul.f32 %v848, %v750
        %v921 = vmul.f32 %v849, %v754
        %v922 = vmul.f32 %v850, %v758
        %v923 = vmul.f32 %v851, %v762
        %v924 = vmul.f32 %v908, %v782
        %v925 = vmul.f32 %v909, %v786
        %v926 = vmul.f32 %v910, %v790
        %v927 = vmul.f32 %v911, %v794
        %v928 = vmul.f32 %v912, %v798
        %v929 = vmul.f32 %v913, %v802
        %v930 = vmul.f32 %v914, %v806
        %v931 = vmul.f32 %v915, %v810
        %v932 = vadd.f32 %v916, %v924
        %v933 = vadd.f32 %v917, %v925
        %v934 = vadd.f32 %v918, %v926
        %v935 = vadd.f32 %v919, %v927
        %v936 = vadd.f32 %v920, %v928
        %v937 = vadd.f32 %v921, %v929
        %v938 = vadd.f32 %v922, %v930
        %v939 = vadd.f32 %v923, %v931
        %940 = vst.msk [vmem:[%s322] sm:$0xf] %vm835, %v932
        %941 = vst.msk [vmem:[%s322 + $0x4] sm:$0xf] %vm835, %v933
        %942 = vst.msk [vmem:[%s322 + $0x8] sm:$0xf] %vm835, %v934
        %943 = vst.msk [vmem:[%s322 + $0xc] sm:$0xf] %vm835, %v935
        %944 = vst.msk [vmem:[%s322 + $0x10] sm:$0xf] %vm835, %v936
        %945 = vst.msk [vmem:[%s322 + $0x14] sm:$0xf] %vm835, %v937
        %946 = vst.msk [vmem:[%s322 + $0x18] sm:$0xf] %vm835, %v938
        %947 = vst.msk [vmem:[%s322 + $0x1c] sm:$0xf] %vm835, %v939
        %s948 = sand.u32 %s154, 1
        %s949 = scalar_lea.sflag [#allocation6], %s948
        %s950 = sand.u32 %s154, 1
        %s951 = smul.addr %s950, 32
        %s952 = scalar_lea.vmem [#allocation9], %s951
        %s953 = sand.u32 %s182, 1
        %s954 = scalar_lea.sflag [#allocation11], %s953
        %s955 = sand.u32 %s182, 1
        %s956 = smul.addr %s955, 32
        %s957 = scalar_lea.vmem [#allocation10], %s956
        // Predicated region
        $region45: #{tpu_custom_call.1} parent=35 // pred_check
          %p958 = pneg %p164
        $region46: #{tpu_custom_call.1} parent=35 // pred_check_branch
          %960 = sbr.rel (%p958) target = $region48
        $region47: #{tpu_custom_call.1} parent=35 // pred_region
          %s961 = smul.u32 8, %s39
          %s963 = ssub.s32 512, 512
          %964 = vsyncadd %s949, %s963
          %s965 = smul.addr %s38, 8
          %s966 = sadd.s32 %s961, %s965
          %s967 = smul.addr %s966, 64
          %s968 = scalar_lea.hbm %s5, %s967
          %s969 = sshll.u32 %s952, 4
          %s970 = int_to_ptr.vmem [resolvable:$true] %s969
          %975 = dma.vmem_to_hbm [thread:$0]  %s970, 512, %s968, %s949, 64, 64, 4
        $region48: #{tpu_custom_call.1} parent=35 // pred_fallthru
          _
        // Predicated region
        $region49: #{tpu_custom_call.1} parent=35 // pred_check
          %p976 = pneg %p192
        $region50: #{tpu_custom_call.1} parent=35 // pred_check_branch
          %978 = sbr.rel (%p976) target = $region52
        $region51: #{tpu_custom_call.1} parent=35 // pred_region
          %s979 = smul.u32 8, %s39
          %s981 = ssub.s32 512, 512
          %982 = vsyncadd %s954, %s981
          %s983 = smul.addr %s38, 8
          %s984 = sadd.s32 %s979, %s983
          %s985 = smul.addr %s984, 64
          %s986 = scalar_lea.hbm %s6, %s985
          %s987 = sshll.u32 %s957, 4
          %s988 = int_to_ptr.vmem [resolvable:$true] %s987
          %993 = dma.vmem_to_hbm [thread:$0]  %s988, 512, %s986, %s954, 64, 64, 4
        $region52: #{tpu_custom_call.1} parent=35 // pred_fallthru
          _
      $region36: #{tpu_custom_call.1} parent=5 // pred_fallthru
        _
      %p994 = scmp.le.s32.totalorder 2, %s29
      // Predicated region
      $region53: #{tpu_custom_call.1} parent=5 // pred_check
        %p995 = pneg %p994
      $region54: #{tpu_custom_call.1} parent=5 // pred_check_branch
        %997 = sbr.rel (%p995) target = $region56
      $region55: #{tpu_custom_call.1} parent=5 // pred_region
        %s998 = ssub.s32 %s29, 2
        // Predicated region
        $region57: #{tpu_custom_call.1} parent=55 // pred_check
          %p999 = pneg %p170
        $region58: #{tpu_custom_call.1} parent=55 // pred_check_branch
          %1001 = sbr.rel (%p999) target = $region60
        $region59: #{tpu_custom_call.1} parent=55 // pred_region
          %s1002 = sand.u32 %s155, 1
          %s1003 = scalar_lea.sflag [#allocation6], %s1002
          %s1004 = sand.u32 %s155, 1
          %s1005 = smul.addr %s1004, 32
          %s1006 = scalar_lea.vmem [#allocation9], %s1005
          %1007 = dma.done %s1003, 512
        $region60: #{tpu_custom_call.1} parent=55 // pred_fallthru
          _
        // Predicated region
        $region61: #{tpu_custom_call.1} parent=55 // pred_check
          %p1008 = pneg %p198
        $region62: #{tpu_custom_call.1} parent=55 // pred_check_branch
          %1010 = sbr.rel (%p1008) target = $region64
        $region63: #{tpu_custom_call.1} parent=55 // pred_region
          %s1011 = sand.u32 %s183, 1
          %s1012 = scalar_lea.sflag [#allocation11], %s1011
          %s1013 = sand.u32 %s183, 1
          %s1014 = smul.addr %s1013, 32
          %s1015 = scalar_lea.vmem [#allocation10], %s1014
          %1016 = dma.done %s1012, 512
        $region64: #{tpu_custom_call.1} parent=55 // pred_fallthru
          _
      $region56: #{tpu_custom_call.1} parent=5 // pred_fallthru
        _
    $region6: #{tpu_custom_call.1} parent=1 // loop_footer
      %s33 = sadd.s32 1, %s29
    $region7: #{tpu_custom_call.1} parent=1 // loop_footer_branch
      %28 = sbr.rel target = $region3
    $region8: #{tpu_custom_call.1} parent=1 // loop_exit
      _
    %1017 = vsyncpa [#allocation5], 1
    %s1018 = scalar_lea.sflag [#allocation5], 1
    %1019 = vsyncpa %s1018, 1
    %1020 = vsyncpa [#allocation8], 1
    %s1021 = scalar_lea.sflag [#allocation8], 1
    %1022 = vsyncpa %s1021, 1
    %1023 = vsyncpa [#allocation6], 1
    %s1024 = scalar_lea.sflag [#allocation6], 1
    %1025 = vsyncpa %s1024, 1
    %1026 = vsyncpa [#allocation11], 1
    %s1027 = scalar_lea.sflag [#allocation11], 1
    %1028 = vsyncpa %s1027, 1

</llo_original>
